<compile_context>
chip_gen: v7x
topology: tpu7x:2x2x1
jax: 0.10.0
libtpu: 0.0.40
codegen_flags: <defaults>
</compile_context>

<pallas_src>
from collections import OrderedDict
from functools import partial

import jax
import jax.numpy as jnp
from jax.experimental import pallas as pl
from jax.experimental.pallas import tpu as pltpu

_LANE = 128
_SUBLANE = 8


def _round_up(x, m):
    return ((x + m - 1) // m) * m


def _controller_kernel(x_ref, w1_ref, b1_ref, w2_ref, b2_ref, wh_ref, bh_ref,
                       out_ref, *, head_slices):
    """Fused backbone + all heads + per-head softmax for one batch tile."""
    wdt = w1_ref.dtype                       # bf16 (MXU-native) or f32
    x = x_ref[...].astype(wdt)

    # Backbone: Linear -> ReLU -> Linear -> ReLU, f32 accumulation + f32 biases.
    h = jnp.dot(x, w1_ref[...], preferred_element_type=jnp.float32) + b1_ref[...]
    h = jnp.maximum(h, 0.0)
    h = jnp.dot(h.astype(wdt), w2_ref[...],
                preferred_element_type=jnp.float32) + b2_ref[...]
    h = jnp.maximum(h, 0.0)

    # One MXU pass for ALL heads (concatenated weights); bias added once.
    logits = jnp.dot(h.astype(wdt), wh_ref[...],
                     preferred_element_type=jnp.float32) + bh_ref[...]

    p = out_ref.shape[1]
    col = jax.lax.broadcasted_iota(jnp.int32, (1, p), 1)

    # Phase 1: per-head row max scattered into ONE (TB, P) shift slab.
    shift = jnp.zeros_like(logits)
    masks = []
    for off, hd in head_slices:
        mask = jnp.logical_and(col >= off, col < off + hd)      # (1, P)
        masks.append(mask)
        m = jnp.max(jnp.where(mask, logits, -jnp.inf), axis=1, keepdims=True)
        shift = shift + jnp.where(mask, m, 0.0)

    # ONE exp over the whole slab (EUP has a single slot; cost no longer scales
    # with head count).  Every column is shifted by its own head's max, so
    # exp <= 1 everywhere (padded columns: logits == shift == 0).
    e = jnp.exp(logits - shift)

    # Phase 2: per-head denominators + exact reciprocals scattered back.
    inv = jnp.zeros_like(logits)
    for mask in masks:
        denom = jnp.sum(jnp.where(mask, e, 0.0), axis=1, keepdims=True)
        inv = inv + jnp.where(mask, 1.0 / denom, 0.0)            # exact divide on (TB,1)

    # Single lane-dense store of the full (TB, P) slab.
    out_ref[...] = (e * inv).astype(out_ref.dtype)


def pack_params(params, head_out_dims: OrderedDict, weight_dtype=jnp.bfloat16):
    """One-time packing: sublane-align fan-in, 128-lane-pad fan-outs, fuse heads."""
    in_dim, out_dim = params["w1"].shape
    Kp = _round_up(in_dim, _SUBLANE)          # NOT padded to 128 (MXU pads K for free)
    N = _round_up(out_dim, _LANE)
    head_dims = list(head_out_dims.values())
    total = sum(head_dims)
    P = _round_up(total, _LANE)

    f32 = jnp.float32
    w1 = jnp.zeros((Kp, N), f32).at[:in_dim, :out_dim].set(params["w1"]).astype(weight_dtype)
    b1 = jnp.zeros((1, N), f32).at[:, :out_dim].set(params["b1"])
    w2 = jnp.zeros((N, N), f32).at[:out_dim, :out_dim].set(params["w2"]).astype(weight_dtype)
    b2 = jnp.zeros((1, N), f32).at[:, :out_dim].set(params["b2"])

    wh_cat = jnp.concatenate([params["heads"][n]["w"] for n in head_out_dims], axis=1)
    bh_cat = jnp.concatenate([params["heads"][n]["b"] for n in head_out_dims], axis=1)
    wh = jnp.zeros((N, P), f32).at[:out_dim, :total].set(wh_cat).astype(weight_dtype)
    bh = jnp.zeros((1, P), f32).at[:, :total].set(bh_cat)

    head_slices, off = [], 0
    for d in head_dims:
        head_slices.append((off, d))
        off += d

    return dict(w1=w1, b1=b1, w2=w2, b2=b2, wh=wh, bh=bh,
                in_dim=in_dim, Kp=Kp, N=N, P=P,
                head_slices=tuple(head_slices))


def controller_forward(x, packed, head_out_dims: OrderedDict):
    """Run the fused Pallas kernel. Returns OrderedDict{name: (B, head_out) probs}."""
    B, in_dim = x.shape
    Kp, N, P = packed["Kp"], packed["N"], packed["P"]
    head_slices = packed["head_slices"]

    # Batch tile: aim for >= 4 grid steps (2 per TC on v7x), 8-row aligned,
    # capped at 256 so batch-padding waste stays small.
    TB = min(256, _round_up(max(pl.cdiv(B, 4), 1), _SUBLANE))
    Bp = _round_up(B, TB)

    xp = x
    if Bp != B or Kp != in_dim:
        xp = jnp.pad(x, ((0, Bp - B), (0, Kp - in_dim)))   # tiny pad only when needed

    kernel = partial(_controller_kernel, head_slices=head_slices)

    # Grid-invariant weights/biases: single-buffer them (no point double-buffering
    # a constant block) to halve their VMEM footprint — matters on v7x (64 MiB).
    def wspec(shape):
        return pl.BlockSpec(shape, lambda i: (0, 0), pipeline_mode=pl.Buffered(1))

    out = pl.pallas_call(
        kernel,
        out_shape=jax.ShapeDtypeStruct((Bp, P), jnp.float32),
        grid=(Bp // TB,),
        in_specs=[
            pl.BlockSpec((TB, Kp), lambda i: (i, 0)),   # x: streamed over batch, unpadded K
            wspec((Kp, N)),                             # w1 (resident)
            wspec((1, N)),                              # b1
            wspec((N, N)),                              # w2
            wspec((1, N)),                              # b2
            wspec((N, P)),                              # fused head weights
            wspec((1, P)),                              # fused head biases
        ],
        out_specs=pl.BlockSpec((TB, P), lambda i: (i, 0)),
        compiler_params=pltpu.CompilerParams(
            dimension_semantics=("parallel",),          # megacore sharding on v7x
            vmem_limit_bytes=32 * 1024 * 1024,          # explicit, safe on v5e/v6e/v7x
        ),
    )(xp, packed["w1"], packed["b1"], packed["w2"], packed["b2"],
      packed["wh"], packed["bh"])

    result = OrderedDict()
    for name, (off, hd) in zip(head_out_dims, head_slices):
        result[name] = out[:B, off:off + hd]
    return result


def init_params(key, in_dim, out_dim, head_out_dims: OrderedDict):
    """Deterministic synthetic parameters (PyTorch-Linear-like uniform init)."""
    def linear(k, fan_in, fan_out):
        kw, kb = jax.random.split(k)
        bound = 1.0 / jnp.sqrt(jnp.float32(fan_in))
        w = jax.random.uniform(kw, (fan_in, fan_out), jnp.float32, -bound, bound)
        b = jax.random.uniform(kb, (1, fan_out), jnp.float32, -bound, bound)
        return w, b

    keys = jax.random.split(key, 2 + len(head_out_dims))
    w1, b1 = linear(keys[0], in_dim, out_dim)
    w2, b2 = linear(keys[1], out_dim, out_dim)
    heads = OrderedDict()
    for i, (name, hdim) in enumerate(head_out_dims.items()):
        wh, bh = linear(keys[2 + i], out_dim, hdim)
        heads[name] = {"w": wh, "b": bh}
    return {"w1": w1, "b1": b1, "w2": w2, "b2": b2, "heads": heads}


def reference_forward(x, params, head_out_dims: OrderedDict):
    """Pure-JAX reference for correctness checking."""
    h = jnp.maximum(x @ params["w1"] + params["b1"], 0.0)
    h = jnp.maximum(h @ params["w2"] + params["b2"], 0.0)
    out = OrderedDict()
    for name in head_out_dims:
        logits = h @ params["heads"][name]["w"] + params["heads"][name]["b"]
        out[name] = jax.nn.softmax(logits, axis=1)
    return out


if __name__ == "__main__":
    batch = 2
    in_dim = 16
    out_dim = 32
    head_out_dims = OrderedDict([("steering", 8), ("throttle", 4)])

    key = jax.random.PRNGKey(0)
    k_params, k_x = jax.random.split(key)
    params = init_params(k_params, in_dim, out_dim, head_out_dims)
    x = jax.random.normal(k_x, (batch, in_dim), jnp.float32)

    refs = reference_forward(x, params, head_out_dims)

    # ---- f32 weight path: near-exact parity with the reference -------------
    packed_f32 = pack_params(params, head_out_dims, weight_dtype=jnp.float32)
    outs = controller_forward(x, packed_f32, head_out_dims)
    outs = jax.tree_util.tree_map(jax.block_until_ready, outs)
    for name in head_out_dims:
        assert outs[name].shape == (batch, head_out_dims[name]), name
        # Exact divide -> softmax rows sum to 1 up to f32 rounding.
        assert jnp.allclose(jnp.sum(outs[name], axis=1), 1.0, atol=1e-3), name
        assert jnp.allclose(outs[name], refs[name], atol=2e-3, rtol=2e-3), name

    # ---- bf16 weight path (v6e/v7x MXU-native): looser operand-rounding tol --
    packed_bf16 = pack_params(params, head_out_dims, weight_dtype=jnp.bfloat16)
    outs_bf16 = controller_forward(x, packed_bf16, head_out_dims)
    outs_bf16 = jax.tree_util.tree_map(jax.block_until_ready, outs_bf16)
    for name in head_out_dims:
        assert outs_bf16[name].shape == (batch, head_out_dims[name]), name
        assert jnp.allclose(jnp.sum(outs_bf16[name], axis=1), 1.0, atol=1e-3), name
        assert jnp.allclose(outs_bf16[name], refs[name], atol=2e-2, rtol=2e-2), name

    print("KERNEL_OK")
</pallas_src>

<mosaic_0001>
module attributes {stable_mosaic.version = 11 : i64} {
  func.func @_controller_kernel(%arg0: i32, %arg1: memref<8x16xf32, #tpu.memory_space<vmem>>, %arg2: memref<16x128xf32, #tpu.memory_space<vmem>>, %arg3: memref<1x128xf32, #tpu.memory_space<vmem>>, %arg4: memref<128x128xf32, #tpu.memory_space<vmem>>, %arg5: memref<1x128xf32, #tpu.memory_space<vmem>>, %arg6: memref<128x128xf32, #tpu.memory_space<vmem>>, %arg7: memref<1x128xf32, #tpu.memory_space<vmem>>, %arg8: memref<8x128xf32, #tpu.memory_space<vmem>>) attributes {dimension_semantics = [#tpu.dimension_semantics<parallel>], iteration_bounds = array<i64: 1>, scalar_prefetch = 0 : i64, scratch_operands = 0 : i64, tpu.core_type = #tpu.core_type<tc>, window_params = [{transform_indices = @transform_0, window_bounds = array<i64: 8, 16>}, {pipeline_mode = #tpu.pipeline_mode<synchronous>, transform_indices = @transform_1, window_bounds = array<i64: 16, 128>}, {pipeline_mode = #tpu.pipeline_mode<synchronous>, transform_indices = @transform_2, window_bounds = array<i64: 1, 128>}, {pipeline_mode = #tpu.pipeline_mode<synchronous>, transform_indices = @transform_3, window_bounds = array<i64: 128, 128>}, {pipeline_mode = #tpu.pipeline_mode<synchronous>, transform_indices = @transform_4, window_bounds = array<i64: 1, 128>}, {pipeline_mode = #tpu.pipeline_mode<synchronous>, transform_indices = @transform_5, window_bounds = array<i64: 128, 128>}, {pipeline_mode = #tpu.pipeline_mode<synchronous>, transform_indices = @transform_6, window_bounds = array<i64: 1, 128>}, {transform_indices = @transform_7, window_bounds = array<i64: 8, 128>}]} {
    %c0 = arith.constant 0 : index
    %c0_0 = arith.constant 0 : index
    %0 = vector.load %arg1[%c0, %c0_0] : memref<8x16xf32, #tpu.memory_space<vmem>>, vector<8x16xf32>
    %c0_1 = arith.constant 0 : index
    %c0_2 = arith.constant 0 : index
    %1 = vector.load %arg2[%c0_1, %c0_2] : memref<16x128xf32, #tpu.memory_space<vmem>>, vector<16x128xf32>
    %cst = arith.constant dense<0.000000e+00> : vector<8x128xf32>
    %2 = tpu.matmul %0, %1, %cst {dimension_numbers = #tpu.dot_dimension_numbers<[1], [0], [0], [1], [0, 0, 1, 1], [], []>} : vector<8x16xf32>, vector<16x128xf32>, vector<8x128xf32> -> vector<8x128xf32>
    %c0_3 = arith.constant 0 : index
    %c0_4 = arith.constant 0 : index
    %3 = vector.load %arg3[%c0_3, %c0_4] : memref<1x128xf32, #tpu.memory_space<vmem>>, vector<1x128xf32>
    %4 = vector.broadcast %3 : vector<1x128xf32> to vector<8x128xf32>
    %5 = arith.addf %2, %4 : vector<8x128xf32>
    %cst_5 = arith.constant 0.000000e+00 : f32
    %6 = vector.broadcast %cst_5 : f32 to vector<8x128xf32>
    %7 = arith.maximumf %5, %6 : vector<8x128xf32>
    %c0_6 = arith.constant 0 : index
    %c0_7 = arith.constant 0 : index
    %8 = vector.load %arg4[%c0_6, %c0_7] : memref<128x128xf32, #tpu.memory_space<vmem>>, vector<128x128xf32>
    %cst_8 = arith.constant dense<0.000000e+00> : vector<8x128xf32>
    %9 = tpu.matmul %7, %8, %cst_8 {dimension_numbers = #tpu.dot_dimension_numbers<[1], [0], [0], [1], [0, 0, 1, 1], [], []>} : vector<8x128xf32>, vector<128x128xf32>, vector<8x128xf32> -> vector<8x128xf32>
    %c0_9 = arith.constant 0 : index
    %c0_10 = arith.constant 0 : index
    %10 = vector.load %arg5[%c0_9, %c0_10] : memref<1x128xf32, #tpu.memory_space<vmem>>, vector<1x128xf32>
    %11 = vector.broadcast %10 : vector<1x128xf32> to vector<8x128xf32>
    %12 = arith.addf %9, %11 : vector<8x128xf32>
    %cst_11 = arith.constant 0.000000e+00 : f32
    %13 = vector.broadcast %cst_11 : f32 to vector<8x128xf32>
    %14 = arith.maximumf %12, %13 : vector<8x128xf32>
    %c0_12 = arith.constant 0 : index
    %c0_13 = arith.constant 0 : index
    %15 = vector.load %arg6[%c0_12, %c0_13] : memref<128x128xf32, #tpu.memory_space<vmem>>, vector<128x128xf32>
    %cst_14 = arith.constant dense<0.000000e+00> : vector<8x128xf32>
    %16 = tpu.matmul %14, %15, %cst_14 {dimension_numbers = #tpu.dot_dimension_numbers<[1], [0], [0], [1], [0, 0, 1, 1], [], []>} : vector<8x128xf32>, vector<128x128xf32>, vector<8x128xf32> -> vector<8x128xf32>
    %c0_15 = arith.constant 0 : index
    %c0_16 = arith.constant 0 : index
    %17 = vector.load %arg7[%c0_15, %c0_16] : memref<1x128xf32, #tpu.memory_space<vmem>>, vector<1x128xf32>
    %18 = vector.broadcast %17 : vector<1x128xf32> to vector<8x128xf32>
    %19 = arith.addf %16, %18 : vector<8x128xf32>
    %20 = tpu.iota {dimensions = array<i32: 1>} : vector<1x128xi32>
    %cst_17 = arith.constant 0.000000e+00 : f32
    %21 = vector.broadcast %cst_17 : f32 to vector<8x128xf32>
    %c0_i32 = arith.constant 0 : i32
    %22 = vector.broadcast %c0_i32 : i32 to vector<1x128xi32>
    %23 = arith.cmpi sge, %20, %22 : vector<1x128xi32>
    %c8_i32 = arith.constant 8 : i32
    %24 = vector.broadcast %c8_i32 : i32 to vector<1x128xi32>
    %25 = arith.cmpi slt, %20, %24 : vector<1x128xi32>
    %26 = arith.andi %23, %25 : vector<1x128xi1>
    %cst_18 = arith.constant 0xFF800000 : f32
    %27 = vector.shape_cast %26 : vector<1x128xi1> to vector<1x128xi1>
    %28 = vector.broadcast %27 : vector<1x128xi1> to vector<8x128xi1>
    %29 = vector.broadcast %cst_18 : f32 to vector<8x128xf32>
    %30 = arith.select %28, %19, %29 : vector<8x128xi1>, vector<8x128xf32>
    %cst_19 = arith.constant dense<0xFF800000> : vector<8xf32>
    %31 = vector.multi_reduction <maximumf>, %30, %cst_19 [1] : vector<8x128xf32> to vector<8xf32>
    %32 = vector.shape_cast %31 : vector<8xf32> to vector<8x1xf32>
    %cst_20 = arith.constant 0.000000e+00 : f32
    %33 = vector.shape_cast %26 : vector<1x128xi1> to vector<1x128xi1>
    %34 = vector.broadcast %33 : vector<1x128xi1> to vector<8x128xi1>
    %35 = vector.shape_cast %32 : vector<8x1xf32> to vector<8x1xf32>
    %36 = vector.broadcast %35 : vector<8x1xf32> to vector<8x128xf32>
    %37 = vector.broadcast %cst_20 : f32 to vector<8x128xf32>
    %38 = arith.select %34, %36, %37 : vector<8x128xi1>, vector<8x128xf32>
    %39 = arith.addf %21, %38 : vector<8x128xf32>
    %c8_i32_21 = arith.constant 8 : i32
    %40 = vector.broadcast %c8_i32_21 : i32 to vector<1x128xi32>
    %41 = arith.cmpi sge, %20, %40 : vector<1x128xi32>
    %c12_i32 = arith.constant 12 : i32
    %42 = vector.broadcast %c12_i32 : i32 to vector<1x128xi32>
    %43 = arith.cmpi slt, %20, %42 : vector<1x128xi32>
    %44 = arith.andi %41, %43 : vector<1x128xi1>
    %cst_22 = arith.constant 0xFF800000 : f32
    %45 = vector.shape_cast %44 : vector<1x128xi1> to vector<1x128xi1>
    %46 = vector.broadcast %45 : vector<1x128xi1> to vector<8x128xi1>
    %47 = vector.broadcast %cst_22 : f32 to vector<8x128xf32>
    %48 = arith.select %46, %19, %47 : vector<8x128xi1>, vector<8x128xf32>
    %cst_23 = arith.constant dense<0xFF800000> : vector<8xf32>
    %49 = vector.multi_reduction <maximumf>, %48, %cst_23 [1] : vector<8x128xf32> to vector<8xf32>
    %50 = vector.shape_cast %49 : vector<8xf32> to vector<8x1xf32>
    %cst_24 = arith.constant 0.000000e+00 : f32
    %51 = vector.shape_cast %44 : vector<1x128xi1> to vector<1x128xi1>
    %52 = vector.broadcast %51 : vector<1x128xi1> to vector<8x128xi1>
    %53 = vector.shape_cast %50 : vector<8x1xf32> to vector<8x1xf32>
    %54 = vector.broadcast %53 : vector<8x1xf32> to vector<8x128xf32>
    %55 = vector.broadcast %cst_24 : f32 to vector<8x128xf32>
    %56 = arith.select %52, %54, %55 : vector<8x128xi1>, vector<8x128xf32>
    %57 = arith.addf %39, %56 : vector<8x128xf32>
    %58 = arith.subf %19, %57 : vector<8x128xf32>
    %59 = math.exp %58 : vector<8x128xf32>
    %cst_25 = arith.constant 0.000000e+00 : f32
    %60 = vector.broadcast %cst_25 : f32 to vector<8x128xf32>
    %cst_26 = arith.constant 0.000000e+00 : f32
    %61 = vector.shape_cast %26 : vector<1x128xi1> to vector<1x128xi1>
    %62 = vector.broadcast %61 : vector<1x128xi1> to vector<8x128xi1>
    %63 = vector.broadcast %cst_26 : f32 to vector<8x128xf32>
    %64 = arith.select %62, %59, %63 : vector<8x128xi1>, vector<8x128xf32>
    %cst_27 = arith.constant dense<0.000000e+00> : vector<8xf32>
    %65 = vector.multi_reduction <add>, %64, %cst_27 [1] : vector<8x128xf32> to vector<8xf32>
    %66 = vector.shape_cast %65 : vector<8xf32> to vector<8x1xf32>
    %cst_28 = arith.constant 1.000000e+00 : f32
    %67 = vector.broadcast %cst_28 : f32 to vector<8x1xf32>
    %68 = arith.divf %67, %66 : vector<8x1xf32>
    %cst_29 = arith.constant 0.000000e+00 : f32
    %69 = vector.shape_cast %26 : vector<1x128xi1> to vector<1x128xi1>
    %70 = vector.broadcast %69 : vector<1x128xi1> to vector<8x128xi1>
    %71 = vector.shape_cast %68 : vector<8x1xf32> to vector<8x1xf32>
    %72 = vector.broadcast %71 : vector<8x1xf32> to vector<8x128xf32>
    %73 = vector.broadcast %cst_29 : f32 to vector<8x128xf32>
    %74 = arith.select %70, %72, %73 : vector<8x128xi1>, vector<8x128xf32>
    %75 = arith.addf %60, %74 : vector<8x128xf32>
    %cst_30 = arith.constant 0.000000e+00 : f32
    %76 = vector.shape_cast %44 : vector<1x128xi1> to vector<1x128xi1>
    %77 = vector.broadcast %76 : vector<1x128xi1> to vector<8x128xi1>
    %78 = vector.broadcast %cst_30 : f32 to vector<8x128xf32>
    %79 = arith.select %77, %59, %78 : vector<8x128xi1>, vector<8x128xf32>
    %cst_31 = arith.constant dense<0.000000e+00> : vector<8xf32>
    %80 = vector.multi_reduction <add>, %79, %cst_31 [1] : vector<8x128xf32> to vector<8xf32>
    %81 = vector.shape_cast %80 : vector<8xf32> to vector<8x1xf32>
    %cst_32 = arith.constant 1.000000e+00 : f32
    %82 = vector.broadcast %cst_32 : f32 to vector<8x1xf32>
    %83 = arith.divf %82, %81 : vector<8x1xf32>
    %cst_33 = arith.constant 0.000000e+00 : f32
    %84 = vector.shape_cast %44 : vector<1x128xi1> to vector<1x128xi1>
    %85 = vector.broadcast %84 : vector<1x128xi1> to vector<8x128xi1>
    %86 = vector.shape_cast %83 : vector<8x1xf32> to vector<8x1xf32>
    %87 = vector.broadcast %86 : vector<8x1xf32> to vector<8x128xf32>
    %88 = vector.broadcast %cst_33 : f32 to vector<8x128xf32>
    %89 = arith.select %85, %87, %88 : vector<8x128xi1>, vector<8x128xf32>
    %90 = arith.addf %75, %89 : vector<8x128xf32>
    %91 = arith.mulf %59, %90 : vector<8x128xf32>
    %c0_34 = arith.constant 0 : index
    %c0_35 = arith.constant 0 : index
    %92 = vector.load %arg8[%c0_34, %c0_35] : memref<8x128xf32, #tpu.memory_space<vmem>>, vector<8x128xf32>
    tpu.vector_store %arg8[%c0_34, %c0_35], %91 {strides = array<i32>} : memref<8x128xf32, #tpu.memory_space<vmem>>, vector<8x128xf32>,
    return
  }
  func.func @transform_0(%arg0: i32) -> (i32, i32) {
    %c0_i32 = arith.constant 0 : i32
    %c0_i32_0 = arith.constant 0 : i32
    return %arg0, %c0_i32 : i32, i32
  }
  func.func @transform_1(%arg0: i32) -> (i32, i32) {
    %c0_i32 = arith.constant 0 : i32
    %c0_i32_0 = arith.constant 0 : i32
    %c0_i32_1 = arith.constant 0 : i32
    return %c0_i32, %c0_i32_0 : i32, i32
  }
  func.func @transform_2(%arg0: i32) -> (i32, i32) {
    %c0_i32 = arith.constant 0 : i32
    %c0_i32_0 = arith.constant 0 : i32
    %c0_i32_1 = arith.constant 0 : i32
    return %c0_i32, %c0_i32_0 : i32, i32
  }
  func.func @transform_3(%arg0: i32) -> (i32, i32) {
    %c0_i32 = arith.constant 0 : i32
    %c0_i32_0 = arith.constant 0 : i32
    %c0_i32_1 = arith.constant 0 : i32
    return %c0_i32, %c0_i32_0 : i32, i32
  }
  func.func @transform_4(%arg0: i32) -> (i32, i32) {
    %c0_i32 = arith.constant 0 : i32
    %c0_i32_0 = arith.constant 0 : i32
    %c0_i32_1 = arith.constant 0 : i32
    return %c0_i32, %c0_i32_0 : i32, i32
  }
  func.func @transform_5(%arg0: i32) -> (i32, i32) {
    %c0_i32 = arith.constant 0 : i32
    %c0_i32_0 = arith.constant 0 : i32
    %c0_i32_1 = arith.constant 0 : i32
    return %c0_i32, %c0_i32_0 : i32, i32
  }
  func.func @transform_6(%arg0: i32) -> (i32, i32) {
    %c0_i32 = arith.constant 0 : i32
    %c0_i32_0 = arith.constant 0 : i32
    %c0_i32_1 = arith.constant 0 : i32
    return %c0_i32, %c0_i32_0 : i32, i32
  }
  func.func @transform_7(%arg0: i32) -> (i32, i32) {
    %c0_i32 = arith.constant 0 : i32
    %c0_i32_0 = arith.constant 0 : i32
    return %arg0, %c0_i32 : i32, i32
  }
}

</mosaic_0001>

<llo_original>
// kernel: tpu_custom_call.1
$region0: #{tpu_custom_call.1}
  #allocation0 [shape = 'u32[]', space=smem, size = 0x4, offset = 0x4, fixed_abs, tag = 'smem constant byte address 0x4 - core index']
  #allocation1 [shape = 'u32[144,128]{1,0:T(1,128)}', space=vmem, size = 0x12000, scoped, tag = 'internal scratch']
  %s0 = inlined_call_operand.hbm [shape: f32[8,16], index: 0, kind: input, shape index: {}]
  %s1 = inlined_call_operand.hbm [shape: f32[16,128], index: 1, kind: input, shape index: {}]
  %s2 = inlined_call_operand.vmem [shape: f32[1,128], index: 2, kind: input, shape index: {}]
  %s3 = inlined_call_operand.hbm [shape: f32[128,128], index: 3, kind: input, shape index: {}]
  %s4 = inlined_call_operand.vmem [shape: f32[1,128], index: 4, kind: input, shape index: {}]
  %s5 = inlined_call_operand.hbm [shape: f32[128,128], index: 5, kind: input, shape index: {}]
  %s6 = inlined_call_operand.vmem [shape: f32[1,128], index: 6, kind: input, shape index: {}]
  %s7 = inlined_call_operand.hbm [shape: f32[8,128], index: 7, kind: output, shape index: {}]
  %s8 = sld [smem:[#allocation0]]
  $region54: #{tpu_custom_call.1} parent=0
    _
  %s10 = ssub.s32 1, %s8
  %s11 = scalar_select 0, %s10, %s8
  $region1: #{tpu_custom_call.1} parent=0
    #allocation2 [shape = 'u8[4096]{0}', space=vmem, size = 0x1000, scoped, tag = 'input window, operand 0, single buffered']
    #allocation3 [shape = 's32[1]{0}', space=sflag, size = 0x4, scoped, tag = 'scoped memory for tpu_custom_call.1']
    #allocation4 [shape = 's32[1]{0}', space=sflag, size = 0x4, scoped, tag = 'scoped memory for tpu_custom_call.1']
    #allocation5 [shape = 'u8[8192]{0}', space=vmem, size = 0x2000, scoped, tag = 'input window, operand 1, single buffered']
    #allocation6 [shape = 's32[1]{0}', space=sflag, size = 0x4, scoped, tag = 'scoped memory for tpu_custom_call.1']
    #allocation7 [shape = 'u8[65536]{0}', space=vmem, size = 0x10000, scoped, tag = 'input window, operand 3, single buffered']
    #allocation8 [shape = 'u8[65536]{0}', space=vmem, size = 0x10000, scoped, tag = 'input window, operand 5, single buffered']
    #allocation9 [shape = 's32[1]{0}', space=sflag, size = 0x4, scoped, tag = 'scoped memory for tpu_custom_call.1']
    #allocation10 [shape = 'u8[4096]{0}', space=vmem, size = 0x1000, scoped, tag = 'output window, operand 0, single buffered']
    %12 = vsyncpa [#allocation3], 0
    %13 = vsyncpa [#allocation6], 0
    %14 = vsyncpa [#allocation9], 0
    %15 = vsyncpa [#allocation4], 0
    // Predicated region
    $region2: #{tpu_custom_call.1} parent=1 // pred_check
      _
    $region3: #{tpu_custom_call.1} parent=1 // pred_check_branch
      %17 = sbr.rel (0) target = $region5
    $region4: #{tpu_custom_call.1} parent=1 // pred_region
      %s19 = ssub.s32 128, 128
      %20 = vsyncadd [#allocation3], %s19
      %s22 = sshll.u32 [#allocation2], 4
      %s23 = int_to_ptr.vmem [resolvable:$true] %s22
      %25 = dma.hbm_to_vmem [thread:$0]  %s0, 128, %s23, [#allocation3]
    $region5: #{tpu_custom_call.1} parent=1 // pred_fallthru
      _
    // Predicated region
    $region6: #{tpu_custom_call.1} parent=1 // pred_check
      _
    $region7: #{tpu_custom_call.1} parent=1 // pred_check_branch
      %27 = sbr.rel (0) target = $region9
    $region8: #{tpu_custom_call.1} parent=1 // pred_region
      %s29 = ssub.s32 256, 256
      %30 = vsyncadd [#allocation6], %s29
      %s31 = sshll.u32 [#allocation5], 4
      %s32 = int_to_ptr.vmem [resolvable:$true] %s31
      %37 = dma.hbm_to_vmem [thread:$0]  %s1, 256, %s32, [#allocation6], 128, 128, 8
    $region9: #{tpu_custom_call.1} parent=1 // pred_fallthru
      _
    // Predicated region
    $region10: #{tpu_custom_call.1} parent=1 // pred_check
      _
    $region11: #{tpu_custom_call.1} parent=1 // pred_check_branch
      %39 = sbr.rel (0) target = $region13
    $region12: #{tpu_custom_call.1} parent=1 // pred_region
      _
    $region13: #{tpu_custom_call.1} parent=1 // pred_fallthru
      _
    // Predicated region
    $region14: #{tpu_custom_call.1} parent=1 // pred_check
      _
    $region15: #{tpu_custom_call.1} parent=1 // pred_check_branch
      %41 = sbr.rel (0) target = $region17
    $region16: #{tpu_custom_call.1} parent=1 // pred_region
      %s43 = ssub.s32 2048, 2048
      %44 = vsyncadd [#allocation6], %s43
      %s45 = sshll.u32 [#allocation7], 4
      %s46 = int_to_ptr.vmem [resolvable:$true] %s45
      %51 = dma.hbm_to_vmem [thread:$0]  %s3, 2048, %s46, [#allocation6], 128, 128, 8
    $region17: #{tpu_custom_call.1} parent=1 // pred_fallthru
      _
    // Predicated region
    $region18: #{tpu_custom_call.1} parent=1 // pred_check
      _
    $region19: #{tpu_custom_call.1} parent=1 // pred_check_branch
      %53 = sbr.rel (0) target = $region21
    $region20: #{tpu_custom_call.1} parent=1 // pred_region
      _
    $region21: #{tpu_custom_call.1} parent=1 // pred_fallthru
      _
    // Predicated region
    $region22: #{tpu_custom_call.1} parent=1 // pred_check
      _
    $region23: #{tpu_custom_call.1} parent=1 // pred_check_branch
      %55 = sbr.rel (0) target = $region25
    $region24: #{tpu_custom_call.1} parent=1 // pred_region
      %s57 = ssub.s32 2048, 2048
      %58 = vsyncadd [#allocation9], %s57
      %s59 = sshll.u32 [#allocation8], 4
      %s60 = int_to_ptr.vmem [resolvable:$true] %s59
      %65 = dma.hbm_to_vmem [thread:$0]  %s5, 2048, %s60, [#allocation9], 128, 128, 8
    $region25: #{tpu_custom_call.1} parent=1 // pred_fallthru
      _
    // Predicated region
    $region26: #{tpu_custom_call.1} parent=1 // pred_check
      _
    $region27: #{tpu_custom_call.1} parent=1 // pred_check_branch
      %67 = sbr.rel (0) target = $region29
    $region28: #{tpu_custom_call.1} parent=1 // pred_region
      _
    $region29: #{tpu_custom_call.1} parent=1 // pred_fallthru
      _
    // Predicated region
    $region30: #{tpu_custom_call.1} parent=1 // pred_check
      _
    $region31: #{tpu_custom_call.1} parent=1 // pred_check_branch
      %69 = sbr.rel (0) target = $region33
    $region32: #{tpu_custom_call.1} parent=1 // pred_region
      %70 = dma.done [#allocation3], 128
    $region33: #{tpu_custom_call.1} parent=1 // pred_fallthru
      _
    // Predicated region
    $region34: #{tpu_custom_call.1} parent=1 // pred_check
      _
    $region35: #{tpu_custom_call.1} parent=1 // pred_check_branch
      %72 = sbr.rel (0) target = $region37
    $region36: #{tpu_custom_call.1} parent=1 // pred_region
      %73 = dma.done [#allocation6], 256
    $region37: #{tpu_custom_call.1} parent=1 // pred_fallthru
      _
    // Predicated region
    $region38: #{tpu_custom_call.1} parent=1 // pred_check
      _
    $region39: #{tpu_custom_call.1} parent=1 // pred_check_branch
      %75 = sbr.rel (0) target = $region41
    $region40: #{tpu_custom_call.1} parent=1 // pred_region
      %76 = dma.done [#allocation6], 2048
    $region41: #{tpu_custom_call.1} parent=1 // pred_fallthru
      _
    // Predicated region
    $region42: #{tpu_custom_call.1} parent=1 // pred_check
      _
    $region43: #{tpu_custom_call.1} parent=1 // pred_check_branch
      %78 = sbr.rel (0) target = $region45
    $region44: #{tpu_custom_call.1} parent=1 // pred_region
      %79 = dma.done [#allocation9], 2048
    $region45: #{tpu_custom_call.1} parent=1 // pred_fallthru
      _
    %v80 = vld [vmem:[#allocation2] sm:$0xff]
    %v81 = vld [vmem:[#allocation5] sm:$0xff]
    %v82 = vld [vmem:[#allocation5 + $0x8] sm:$0xff]
    %v83 = vld [vmem:[%s2] sm:$0x1]
    %v85 = vlaneseq
    %v86 = vshrl.u32 %v85, 7
    %v87 = vsub.s32 0, %v86
    %v88 = vrot.slane %v83, %v87
    %vm90 = vcmask 130048
    %v92 = vsel %vm90, %v80, 0
    %94 = vmatprep.subr.mxu0 0.0
    %95 = vmatpush1.msra.mxu0 %v81
    %96 = vmatprep.subr.mxu0 0.0
    %97 = vmatpush1.msra.mxu0 %v82
    %98 = vmatprep.subr.mxu0 0.0
    %99 = vmatpush1.msra.mxu0 0.0
    %100 = vmatprep.subr.mxu0 0.0
    %101 = vmatpush1.msra.mxu0 0.0
    %102 = vmatprep.subr.mxu0 0.0
    %103 = vmatpush1.msra.mxu0 0.0
    %104 = vmatprep.subr.mxu0 0.0
    %105 = vmatpush1.msra.mxu0 0.0
    %106 = vmatprep.subr.mxu0 0.0
    %107 = vmatpush1.msra.mxu0 0.0
    %108 = vmatprep.subr.mxu0 0.0
    %109 = vmatpush1.msra.mxu0 0.0
    %110 = vmatprep.subr.mxu0 0.0
    %111 = vmatpush1.msra.mxu0 0.0
    %112 = vmatprep.subr.mxu0 0.0
    %113 = vmatpush1.msra.mxu0 0.0
    %114 = vmatprep.subr.mxu0 0.0
    %115 = vmatpush1.msra.mxu0 0.0
    %116 = vmatprep.subr.mxu0 0.0
    %117 = vmatpush1.msra.mxu0 0.0
    %118 = vmatprep.subr.mxu0 0.0
    %119 = vmatpush1.msra.mxu0 0.0
    %120 = vmatprep.subr.mxu0 0.0
    %121 = vmatpush1.msra.mxu0 0.0
    %122 = vmatprep.subr.mxu0 0.0
    %123 = vmatpush1.msra.mxu0 0.0
    %124 = vmatprep.subr.mxu0 0.0
    %125 = vmatpush1.msra.mxu0 0.0
    %126 = vmatprep.subr.mxu0 0.0
    %127 = vmatpush1.msra.mxu0 0.0
    %128 = vmatprep.subr.mxu0 0.0
    %129 = vmatpush1.msra.mxu0 0.0
    %130 = vmatprep.subr.mxu0 0.0
    %131 = vmatpush1.msra.mxu0 0.0
    %132 = vmatprep.subr.mxu0 0.0
    %133 = vmatpush1.msra.mxu0 0.0
    %134 = vmatprep.subr.mxu0 0.0
    %135 = vmatpush1.msra.mxu0 0.0
    %136 = vmatprep.subr.mxu0 0.0
    %137 = vmatpush1.msra.mxu0 0.0
    %138 = vmatprep.subr.mxu0 0.0
    %139 = vmatpush1.msra.mxu0 0.0
    %140 = vmatprep.subr.mxu0 0.0
    %141 = vmatpush1.msra.mxu0 0.0
    %142 = vmatprep.subr.mxu0 0.0
    %143 = vmatpush1.msra.mxu0 0.0
    %144 = vmatprep.subr.mxu0 0.0
    %145 = vmatpush1.msra.mxu0 0.0
    %146 = vmatprep.subr.mxu0 0.0
    %147 = vmatpush1.msra.mxu0 0.0
    %148 = vmatprep.subr.mxu0 0.0
    %149 = vmatpush1.msra.mxu0 0.0
    %150 = vmatprep.subr.mxu0 0.0
    %151 = vmatpush1.msra.mxu0 0.0
    %152 = vmatprep.subr.mxu0 0.0
    %153 = vmatpush1.msra.mxu0 0.0
    %154 = vmatprep.subr.mxu0 0.0
    %155 = vmatpush1.msra.mxu0 0.0
    %156 = vmatprep.subr.mxu0 0.0
    %157 = vmatpush1.msra.mxu0 0.0
    %158 = vmatprep.mubr.f32.mxu0 0.0
    %159 = vmatmul.mubr.f32.gmra.mrb[0].mxu0 %v92
    %v160 = vpop.f32.mrb[0].mxu0
    %v161 = vadd.f32 %v88, %v160
    %v162 = vpop.f32.mrb[0].mxu0
    %163 = vdwg.mxu0
    %v164 = vmax.f32 %v161, 0.0
    %v165 = vld [vmem:[#allocation7] sm:$0xff]
    %v166 = vld [vmem:[#allocation7 + $0x8] sm:$0xff]
    %v167 = vld [vmem:[#allocation7 + $0x10] sm:$0xff]
    %v168 = vld [vmem:[#allocation7 + $0x18] sm:$0xff]
    %v169 = vld [vmem:[#allocation7 + $0x20] sm:$0xff]
    %v170 = vld [vmem:[#allocation7 + $0x28] sm:$0xff]
    %v171 = vld [vmem:[#allocation7 + $0x30] sm:$0xff]
    %v172 = vld [vmem:[#allocation7 + $0x38] sm:$0xff]
    %v173 = vld [vmem:[#allocation7 + $0x40] sm:$0xff]
    %v174 = vld [vmem:[#allocation7 + $0x48] sm:$0xff]
    %v175 = vld [vmem:[#allocation7 + $0x50] sm:$0xff]
    %v176 = vld [vmem:[#allocation7 + $0x58] sm:$0xff]
    %v177 = vld [vmem:[#allocation7 + $0x60] sm:$0xff]
    %v178 = vld [vmem:[#allocation7 + $0x68] sm:$0xff]
    %v179 = vld [vmem:[#allocation7 + $0x70] sm:$0xff]
    %v180 = vld [vmem:[#allocation7 + $0x78] sm:$0xff]
    %v181 = vld [vmem:[%s4] sm:$0x1]
    %v183 = vlaneseq
    %v184 = vshrl.u32 %v183, 7
    %v185 = vsub.s32 0, %v184
    %v186 = vrot.slane %v181, %v185
    %188 = vmatprep.subr.mxu0 0.0
    %189 = vmatpush1.msra.mxu0 %v165
    %190 = vmatprep.subr.mxu0 0.0
    %191 = vmatpush1.msra.mxu0 %v166
    %192 = vmatprep.subr.mxu0 0.0
    %193 = vmatpush1.msra.mxu0 %v167
    %194 = vmatprep.subr.mxu0 0.0
    %195 = vmatpush1.msra.mxu0 %v168
    %196 = vmatprep.subr.mxu0 0.0
    %197 = vmatpush1.msra.mxu0 %v169
    %198 = vmatprep.subr.mxu0 0.0
    %199 = vmatpush1.msra.mxu0 %v170
    %200 = vmatprep.subr.mxu0 0.0
    %201 = vmatpush1.msra.mxu0 %v171
    %202 = vmatprep.subr.mxu0 0.0
    %203 = vmatpush1.msra.mxu0 %v172
    %204 = vmatprep.subr.mxu0 0.0
    %205 = vmatpush1.msra.mxu0 %v173
    %206 = vmatprep.subr.mxu0 0.0
    %207 = vmatpush1.msra.mxu0 %v174
    %208 = vmatprep.subr.mxu0 0.0
    %209 = vmatpush1.msra.mxu0 %v175
    %210 = vmatprep.subr.mxu0 0.0
    %211 = vmatpush1.msra.mxu0 %v176
    %212 = vmatprep.subr.mxu0 0.0
    %213 = vmatpush1.msra.mxu0 %v177
    %214 = vmatprep.subr.mxu0 0.0
    %215 = vmatpush1.msra.mxu0 %v178
    %216 = vmatprep.subr.mxu0 0.0
    %217 = vmatpush1.msra.mxu0 %v179
    %218 = vmatprep.subr.mxu0 0.0
    %219 = vmatpush1.msra.mxu0 %v180
    %220 = vmatprep.subr.mxu0 0.0
    %221 = vmatpush1.msra.mxu0 0.0
    %222 = vmatprep.subr.mxu0 0.0
    %223 = vmatpush1.msra.mxu0 0.0
    %224 = vmatprep.subr.mxu0 0.0
    %225 = vmatpush1.msra.mxu0 0.0
    %226 = vmatprep.subr.mxu0 0.0
    %227 = vmatpush1.msra.mxu0 0.0
    %228 = vmatprep.subr.mxu0 0.0
    %229 = vmatpush1.msra.mxu0 0.0
    %230 = vmatprep.subr.mxu0 0.0
    %231 = vmatpush1.msra.mxu0 0.0
    %232 = vmatprep.subr.mxu0 0.0
    %233 = vmatpush1.msra.mxu0 0.0
    %234 = vmatprep.subr.mxu0 0.0
    %235 = vmatpush1.msra.mxu0 0.0
    %236 = vmatprep.subr.mxu0 0.0
    %237 = vmatpush1.msra.mxu0 0.0
    %238 = vmatprep.subr.mxu0 0.0
    %239 = vmatpush1.msra.mxu0 0.0
    %240 = vmatprep.subr.mxu0 0.0
    %241 = vmatpush1.msra.mxu0 0.0
    %242 = vmatprep.subr.mxu0 0.0
    %243 = vmatpush1.msra.mxu0 0.0
    %244 = vmatprep.subr.mxu0 0.0
    %245 = vmatpush1.msra.mxu0 0.0
    %246 = vmatprep.subr.mxu0 0.0
    %247 = vmatpush1.msra.mxu0 0.0
    %248 = vmatprep.subr.mxu0 0.0
    %249 = vmatpush1.msra.mxu0 0.0
    %250 = vmatprep.subr.mxu0 0.0
    %251 = vmatpush1.msra.mxu0 0.0
    %252 = vmatprep.mubr.f32.mxu0 0.0
    %253 = vmatmul.mubr.f32.gmra.mrb[0].mxu0 %v164
    %v254 = vpop.f32.mrb[0].mxu0
    %v255 = vadd.f32 %v186, %v254
    %v256 = vpop.f32.mrb[0].mxu0
    %257 = vdwg.mxu0
    %v258 = vmax.f32 %v255, 0.0
    %v259 = vld [vmem:[#allocation8] sm:$0xff]
    %v260 = vld [vmem:[#allocation8 + $0x8] sm:$0xff]
    %v261 = vld [vmem:[#allocation8 + $0x10] sm:$0xff]
    %v262 = vld [vmem:[#allocation8 + $0x18] sm:$0xff]
    %v263 = vld [vmem:[#allocation8 + $0x20] sm:$0xff]
    %v264 = vld [vmem:[#allocation8 + $0x28] sm:$0xff]
    %v265 = vld [vmem:[#allocation8 + $0x30] sm:$0xff]
    %v266 = vld [vmem:[#allocation8 + $0x38] sm:$0xff]
    %v267 = vld [vmem:[#allocation8 + $0x40] sm:$0xff]
    %v268 = vld [vmem:[#allocation8 + $0x48] sm:$0xff]
    %v269 = vld [vmem:[#allocation8 + $0x50] sm:$0xff]
    %v270 = vld [vmem:[#allocation8 + $0x58] sm:$0xff]
    %v271 = vld [vmem:[#allocation8 + $0x60] sm:$0xff]
    %v272 = vld [vmem:[#allocation8 + $0x68] sm:$0xff]
    %v273 = vld [vmem:[#allocation8 + $0x70] sm:$0xff]
    %v274 = vld [vmem:[#allocation8 + $0x78] sm:$0xff]
    %v275 = vld [vmem:[%s6] sm:$0x1]
    %v277 = vlaneseq
    %v278 = vshrl.u32 %v277, 7
    %v279 = vsub.s32 0, %v278
    %v280 = vrot.slane %v275, %v279
    %282 = vmatprep.subr.mxu0 0.0
    %283 = vmatpush1.msra.mxu0 %v259
    %284 = vmatprep.subr.mxu0 0.0
    %285 = vmatpush1.msra.mxu0 %v260
    %286 = vmatprep.subr.mxu0 0.0
    %287 = vmatpush1.msra.mxu0 %v261
    %288 = vmatprep.subr.mxu0 0.0
    %289 = vmatpush1.msra.mxu0 %v262
    %290 = vmatprep.subr.mxu0 0.0
    %291 = vmatpush1.msra.mxu0 %v263
    %292 = vmatprep.subr.mxu0 0.0
    %293 = vmatpush1.msra.mxu0 %v264
    %294 = vmatprep.subr.mxu0 0.0
    %295 = vmatpush1.msra.mxu0 %v265
    %296 = vmatprep.subr.mxu0 0.0
    %297 = vmatpush1.msra.mxu0 %v266
    %298 = vmatprep.subr.mxu0 0.0
    %299 = vmatpush1.msra.mxu0 %v267
    %300 = vmatprep.subr.mxu0 0.0
    %301 = vmatpush1.msra.mxu0 %v268
    %302 = vmatprep.subr.mxu0 0.0
    %303 = vmatpush1.msra.mxu0 %v269
    %304 = vmatprep.subr.mxu0 0.0
    %305 = vmatpush1.msra.mxu0 %v270
    %306 = vmatprep.subr.mxu0 0.0
    %307 = vmatpush1.msra.mxu0 %v271
    %308 = vmatprep.subr.mxu0 0.0
    %309 = vmatpush1.msra.mxu0 %v272
    %310 = vmatprep.subr.mxu0 0.0
    %311 = vmatpush1.msra.mxu0 %v273
    %312 = vmatprep.subr.mxu0 0.0
    %313 = vmatpush1.msra.mxu0 %v274
    %314 = vmatprep.subr.mxu0 0.0
    %315 = vmatpush1.msra.mxu0 0.0
    %316 = vmatprep.subr.mxu0 0.0
    %317 = vmatpush1.msra.mxu0 0.0
    %318 = vmatprep.subr.mxu0 0.0
    %319 = vmatpush1.msra.mxu0 0.0
    %320 = vmatprep.subr.mxu0 0.0
    %321 = vmatpush1.msra.mxu0 0.0
    %322 = vmatprep.subr.mxu0 0.0
    %323 = vmatpush1.msra.mxu0 0.0
    %324 = vmatprep.subr.mxu0 0.0
    %325 = vmatpush1.msra.mxu0 0.0
    %326 = vmatprep.subr.mxu0 0.0
    %327 = vmatpush1.msra.mxu0 0.0
    %328 = vmatprep.subr.mxu0 0.0
    %329 = vmatpush1.msra.mxu0 0.0
    %330 = vmatprep.subr.mxu0 0.0
    %331 = vmatpush1.msra.mxu0 0.0
    %332 = vmatprep.subr.mxu0 0.0
    %333 = vmatpush1.msra.mxu0 0.0
    %334 = vmatprep.subr.mxu0 0.0
    %335 = vmatpush1.msra.mxu0 0.0
    %336 = vmatprep.subr.mxu0 0.0
    %337 = vmatpush1.msra.mxu0 0.0
    %338 = vmatprep.subr.mxu0 0.0
    %339 = vmatpush1.msra.mxu0 0.0
    %340 = vmatprep.subr.mxu0 0.0
    %341 = vmatpush1.msra.mxu0 0.0
    %342 = vmatprep.subr.mxu0 0.0
    %343 = vmatpush1.msra.mxu0 0.0
    %344 = vmatprep.subr.mxu0 0.0
    %345 = vmatpush1.msra.mxu0 0.0
    %346 = vmatprep.mubr.f32.mxu0 0.0
    %347 = vmatmul.mubr.f32.gmra.mrb[0].mxu0 %v258
    %v348 = vpop.f32.mrb[0].mxu0
    %v349 = vadd.f32 %v280, %v348
    %v350 = vpop.f32.mrb[0].mxu0
    %351 = vdwg.mxu0
    %v352 = vlaneseq
    %v353 = vand.u32 %v352, 127
    %vm354 = vcmp.ge.s32.totalorder %v353, 0
    %vm355 = vcmp.lt.s32.totalorder %v353, 8
    %vm356 = vmand %vm354, %vm355
    %v357 = vsel %vm356, 1, 0
    %vm358 = vcmp.eq.s32.totalorder %v357, 1
    %v359 = vsel %vm358, %v349, -inf
    %360 = vmax.xlane.f32.xlu0 %v359
    %v361 = vpop.xlane.xlu0 %360
    %v362 = vsel %vm358, %v361, 0.0
    %v363 = vadd.f32 %v362, 0.0
    %vm364 = vcmp.ge.s32.totalorder %v353, 8
    %vm365 = vcmp.lt.s32.totalorder %v353, 12
    %vm366 = vmand %vm364, %vm365
    %v367 = vsel %vm366, 1, 0
    %vm368 = vcmp.eq.s32.totalorder %v367, 1
    %v369 = vsel %vm368, %v349, -inf
    %370 = vmax.xlane.f32.xlu0 %v369
    %v371 = vpop.xlane.xlu0 %370
    %v372 = vsel %vm368, %v371, 0.0
    %v373 = vadd.f32 %v363, %v372
    %v374 = vsub.f32 %v349, %v373
    %v375 = vmul.f32 %v374, 1.442695
    %v376 = vpow.pop %v375
    %v377 = vsel %vm358, %v376, 0.0
    %378 = vadd.xlane.f32.xlu0 %v377
    %v379 = vpop.xlane.xlu0 %378
    %v380 = vrcp.pop %v379
    %v381 = vmul.f32 1.0, %v380
    %v382 = vsel %vm358, %v381, 0.0
    %v383 = vadd.f32 %v382, 0.0
    %v384 = vsel %vm368, %v376, 0.0
    %385 = vadd.xlane.f32.xlu0 %v384
    %v386 = vpop.xlane.xlu0 %385
    %v387 = vrcp.pop %v386
    %v388 = vmul.f32 1.0, %v387
    %v389 = vsel %vm368, %v388, 0.0
    %v390 = vadd.f32 %v383, %v389
    %v391 = vmul.f32 %v376, %v390
    %392 = vst [vmem:[#allocation10] sm:$0xff] %v391
    // Predicated region
    $region46: #{tpu_custom_call.1} parent=1 // pred_check
      _
    $region47: #{tpu_custom_call.1} parent=1 // pred_check_branch
      %394 = sbr.rel (0) target = $region49
    $region48: #{tpu_custom_call.1} parent=1 // pred_region
      %s396 = ssub.s32 128, 128
      %397 = vsyncadd [#allocation4], %s396
      %s399 = sshll.u32 [#allocation10], 4
      %s400 = int_to_ptr.vmem [resolvable:$true] %s399
      %402 = dma.vmem_to_hbm [thread:$0]  %s400, 128, %s7, [#allocation4]
    $region49: #{tpu_custom_call.1} parent=1 // pred_fallthru
      _
    // Predicated region
    $region50: #{tpu_custom_call.1} parent=1 // pred_check
      _
    $region51: #{tpu_custom_call.1} parent=1 // pred_check_branch
      %404 = sbr.rel (0) target = $region53
    $region52: #{tpu_custom_call.1} parent=1 // pred_region
      %405 = dma.done [#allocation4], 128
    $region53: #{tpu_custom_call.1} parent=1 // pred_fallthru
      _
    %406 = vsyncpa [#allocation3], 1
    %407 = vsyncpa [#allocation6], 1
    %408 = vsyncpa [#allocation9], 1
    %409 = vsyncpa [#allocation4], 1

</llo_original>
